<compile_context>
chip_gen: v7x
topology: tpu7x:2x2x1
jax: 0.10.0
libtpu: 0.0.40
codegen_flags: <defaults>
</compile_context>

<pallas_src>
import jax
import jax.numpy as jnp
from jax.experimental import pallas as pl
from jax.experimental.pallas import tpu as pltpu

INPUT_DIM = 5
HIDDEN_DIM = 100
OUTPUT_DIM = 2

IN_PAD = 8            # input feature dim padded to one sublane group
PAD = 128             # hidden/output feature dims padded to one lane group
MAX_BATCH_TILE = 1024 # rows per grid step (VMEM-budget-driven cap)


def _round_up(n, m):
    return ((n + m - 1) // m) * m


def _cdiv(a, b):
    return (a + b - 1) // b


# ----------------------------------------------------------------------------
# Kernel: one batch tile, all (bf16) weights VMEM-resident across grid steps.
# Matmuls ride the MXU with f32 accumulation; bias add + ReLU on the VPU.
# ----------------------------------------------------------------------------
def mlp_kernel(x_ref, w1_ref, ws_ref, bs_ref, o_ref):
    # fc1: (TB, 8) @ (8, 128)  + bias, ReLU
    h = jnp.dot(x_ref[...].astype(jnp.bfloat16), w1_ref[...],
                preferred_element_type=jnp.float32)
    h = jnp.maximum(h + bs_ref[0], 0.0)

    # fc2..fc5: (TB, 128) @ (128, 128) + bias, ReLU   (statically unrolled)
    for k in range(4):
        h = jnp.dot(h.astype(jnp.bfloat16), ws_ref[k],
                    preferred_element_type=jnp.float32)
        h = jnp.maximum(h + bs_ref[k + 1], 0.0)

    # fc6: (TB, 128) @ (128, 128) + bias, no activation (dropout = identity).
    h = jnp.dot(h.astype(jnp.bfloat16), ws_ref[4],
                preferred_element_type=jnp.float32)
    o_ref[...] = h + bs_ref[5]


# ----------------------------------------------------------------------------
# Host-side packing (done once): zero-pad feature dims, cast weights to bf16,
# stack the five 128x128 weights and the six biases into single arrays.
# Padded weight columns / biases are zero, so padded lanes stay exactly zero
# through ReLU and the final [:, :OUTPUT_DIM] slice is exact.
# ----------------------------------------------------------------------------
def pack_params(params):
    (w1, b1) = params[0]
    w1p = jnp.pad(w1, ((0, IN_PAD - w1.shape[0]), (0, PAD - w1.shape[1])))
    w1p = w1p.astype(jnp.bfloat16)                                  # (8, 128)

    ws, bs = [], [jnp.pad(b1, ((0, 0), (0, PAD - b1.shape[1])))]
    for (w, b) in params[1:]:
        ws.append(jnp.pad(w, ((0, PAD - w.shape[0]),
                              (0, PAD - w.shape[1]))).astype(jnp.bfloat16))
        bs.append(jnp.pad(b, ((0, 0), (0, PAD - b.shape[1]))))
    ws = jnp.stack(ws)                                              # (5, 128, 128) bf16
    bs = jnp.stack(bs).astype(jnp.float32)                          # (6, 1, 128)   f32
    return w1p, ws, bs


@jax.jit
def mlp_forward(x, w1p, ws, bs):
    """x: (B, INPUT_DIM); packed params from pack_params()."""
    B = x.shape[0]

    # x.float() done once in the wrapper; pad features only to 8 lanes.
    x = x.astype(jnp.float32)

    # Batch tiling: biggest tile that keeps per-step VMEM tiny, but balanced
    # into >= 2 blocks when B is large (v7x cross-TC sharding opportunity).
    b8 = _round_up(B, 8)
    n_blocks = _cdiv(b8, MAX_BATCH_TILE)
    TB = _round_up(_cdiv(b8, n_blocks), 8)
    n_blocks = _cdiv(b8, TB)
    B_pad = n_blocks * TB

    x = jnp.pad(x, ((0, B_pad - B), (0, IN_PAD - INPUT_DIM)))

    x_spec = pl.BlockSpec((TB, IN_PAD), lambda i: (i, 0))
    w1_spec = pl.BlockSpec((IN_PAD, PAD), lambda i: (0, 0))        # resident
    ws_spec = pl.BlockSpec((5, PAD, PAD), lambda i: (0, 0, 0))     # resident
    bs_spec = pl.BlockSpec((6, 1, PAD), lambda i: (0, 0, 0))       # resident
    out_spec = pl.BlockSpec((TB, PAD), lambda i: (i, 0))           # lane-dense store

    # Advisory cost estimate (padded dims).
    flops = 2 * B_pad * (IN_PAD * PAD + 5 * PAD * PAD)
    bytes_accessed = (4 * (x.size + B_pad * PAD + bs.size)
                      + 2 * (w1p.size + ws.size))
    cost = pl.CostEstimate(flops=flops, transcendentals=0,
                           bytes_accessed=bytes_accessed)

    out_padded = pl.pallas_call(
        mlp_kernel,
        out_shape=jax.ShapeDtypeStruct((B_pad, PAD), jnp.float32),
        grid=(n_blocks,),
        in_specs=[x_spec, w1_spec, ws_spec, bs_spec],
        out_specs=out_spec,
        compiler_params=pltpu.CompilerParams(
            dimension_semantics=("parallel",)),
        cost_estimate=cost,
    )(x, w1p, ws, bs)

    # Logical output is (B, OUTPUT_DIM); padded lanes are exactly zero.
    return out_padded[:B, :OUTPUT_DIM]


# ----------------------------------------------------------------------------
# Init + references
# ----------------------------------------------------------------------------
def init_params(key):
    """nn.Linear-style init: U(-1/sqrt(fan_in), 1/sqrt(fan_in)); W stored (in, out)."""
    dims = [INPUT_DIM] + [HIDDEN_DIM] * 5 + [OUTPUT_DIM]
    params = []
    for i in range(6):
        fan_in, fan_out = dims[i], dims[i + 1]
        key, kw, kb = jax.random.split(key, 3)
        bound = 1.0 / (fan_in ** 0.5)
        w = jax.random.uniform(kw, (fan_in, fan_out), jnp.float32, -bound, bound)
        b = jax.random.uniform(kb, (1, fan_out), jnp.float32, -bound, bound)
        params.append((w, b))
    return params


def mlp_reference(x, params, bf16_weights=False):
    """Pure-JAX reference. bf16_weights=True mimics the kernel's bf16 MXU inputs."""
    h = x.astype(jnp.float32)
    for i, (w, b) in enumerate(params):
        if bf16_weights:
            w = w.astype(jnp.bfloat16).astype(jnp.float32)
            h = h.astype(jnp.bfloat16).astype(jnp.float32)
            h = jnp.dot(h, w) + b
        else:
            h = jnp.dot(h, w, precision=jax.lax.Precision.HIGHEST) + b
        if i < 5:
            h = jnp.maximum(h, 0.0)
    return h


if __name__ == "__main__":
    key = jax.random.PRNGKey(0)
    key, kp = jax.random.split(key)
    params = init_params(kp)
    packed = pack_params(params)

    for batch in (16, 13):   # multiple-of-8 and ragged batch paths
        key, kx = jax.random.split(key)
        x = jax.random.normal(kx, (batch, INPUT_DIM), dtype=jnp.float32)

        out = jax.block_until_ready(mlp_forward(x, *packed))
        assert out.shape == (batch, OUTPUT_DIM), out.shape

        # Tight check vs. a reference that applies the same bf16 input rounding.
        ref_bf16 = mlp_reference(x, params, bf16_weights=True)
        assert jnp.allclose(out, ref_bf16, atol=1e-3, rtol=1e-3), \
            "mismatch vs bf16-rounded reference"

        # Loose check vs. the true f32 reference (bf16 MXU inputs, f32 accumulation).
        ref_f32 = mlp_reference(x, params, bf16_weights=False)
        assert jnp.allclose(out, ref_f32, atol=5e-2, rtol=5e-2), \
            "mismatch vs f32 reference"

    print("KERNEL_OK")
</pallas_src>

<mosaic_0001>
module attributes {stable_mosaic.version = 11 : i64} {
  func.func @mlp_kernel(%arg0: i32, %arg1: memref<16x8xf32, #tpu.memory_space<vmem>>, %arg2: memref<8x128xbf16, #tpu.memory_space<vmem>>, %arg3: memref<5x128x128xbf16, #tpu.memory_space<vmem>>, %arg4: memref<6x1x128xf32, #tpu.memory_space<vmem>>, %arg5: memref<16x128xf32, #tpu.memory_space<vmem>>) attributes {dimension_semantics = [#tpu.dimension_semantics<parallel>], iteration_bounds = array<i64: 1>, scalar_prefetch = 0 : i64, scratch_operands = 0 : i64, tpu.core_type = #tpu.core_type<tc>, window_params = [{transform_indices = @transform_0, window_bounds = array<i64: 16, 8>}, {pipeline_mode = #tpu.pipeline_mode<synchronous>, transform_indices = @transform_1, window_bounds = array<i64: 8, 128>}, {pipeline_mode = #tpu.pipeline_mode<synchronous>, transform_indices = @transform_2, window_bounds = array<i64: 5, 128, 128>}, {pipeline_mode = #tpu.pipeline_mode<synchronous>, transform_indices = @transform_3, window_bounds = array<i64: 6, 1, 128>}, {transform_indices = @transform_4, window_bounds = array<i64: 16, 128>}]} {
    %c0 = arith.constant 0 : index
    %c0_0 = arith.constant 0 : index
    %0 = vector.load %arg1[%c0, %c0_0] : memref<16x8xf32, #tpu.memory_space<vmem>>, vector<16x8xf32>
    %1 = arith.truncf %0 : vector<16x8xf32> to vector<16x8xbf16>
    %c0_1 = arith.constant 0 : index
    %c0_2 = arith.constant 0 : index
    %2 = vector.load %arg2[%c0_1, %c0_2] : memref<8x128xbf16, #tpu.memory_space<vmem>>, vector<8x128xbf16>
    %cst = arith.constant dense<0.000000e+00> : vector<16x128xf32>
    %3 = tpu.matmul %1, %2, %cst {dimension_numbers = #tpu.dot_dimension_numbers<[1], [0], [0], [1], [0, 0, 1, 1], [], []>} : vector<16x8xbf16>, vector<8x128xbf16>, vector<16x128xf32> -> vector<16x128xf32>
    %c0_3 = arith.constant 0 : index
    %c0_4 = arith.constant 0 : index
    %c0_5 = arith.constant 0 : index
    %4 = vector.load %arg4[%c0_3, %c0_4, %c0_5] : memref<6x1x128xf32, #tpu.memory_space<vmem>>, vector<1x1x128xf32>
    %5 = vector.shape_cast %4 : vector<1x1x128xf32> to vector<1x128xf32>
    %6 = vector.broadcast %5 : vector<1x128xf32> to vector<16x128xf32>
    %7 = arith.addf %3, %6 : vector<16x128xf32>
    %cst_6 = arith.constant 0.000000e+00 : f32
    %8 = vector.broadcast %cst_6 : f32 to vector<16x128xf32>
    %9 = arith.maximumf %7, %8 : vector<16x128xf32>
    %10 = arith.truncf %9 : vector<16x128xf32> to vector<16x128xbf16>
    %c0_7 = arith.constant 0 : index
    %c0_8 = arith.constant 0 : index
    %c0_9 = arith.constant 0 : index
    %11 = vector.load %arg3[%c0_7, %c0_8, %c0_9] : memref<5x128x128xbf16, #tpu.memory_space<vmem>>, vector<1x128x128xbf16>
    %12 = vector.shape_cast %11 : vector<1x128x128xbf16> to vector<128x128xbf16>
    %cst_10 = arith.constant dense<0.000000e+00> : vector<16x128xf32>
    %13 = tpu.matmul %10, %12, %cst_10 {dimension_numbers = #tpu.dot_dimension_numbers<[1], [0], [0], [1], [0, 0, 1, 1], [], []>} : vector<16x128xbf16>, vector<128x128xbf16>, vector<16x128xf32> -> vector<16x128xf32>
    %c1 = arith.constant 1 : index
    %c0_11 = arith.constant 0 : index
    %c0_12 = arith.constant 0 : index
    %14 = vector.load %arg4[%c1, %c0_11, %c0_12] : memref<6x1x128xf32, #tpu.memory_space<vmem>>, vector<1x1x128xf32>
    %15 = vector.shape_cast %14 : vector<1x1x128xf32> to vector<1x128xf32>
    %16 = vector.broadcast %15 : vector<1x128xf32> to vector<16x128xf32>
    %17 = arith.addf %13, %16 : vector<16x128xf32>
    %cst_13 = arith.constant 0.000000e+00 : f32
    %18 = vector.broadcast %cst_13 : f32 to vector<16x128xf32>
    %19 = arith.maximumf %17, %18 : vector<16x128xf32>
    %20 = arith.truncf %19 : vector<16x128xf32> to vector<16x128xbf16>
    %c1_14 = arith.constant 1 : index
    %c0_15 = arith.constant 0 : index
    %c0_16 = arith.constant 0 : index
    %21 = vector.load %arg3[%c1_14, %c0_15, %c0_16] : memref<5x128x128xbf16, #tpu.memory_space<vmem>>, vector<1x128x128xbf16>
    %22 = vector.shape_cast %21 : vector<1x128x128xbf16> to vector<128x128xbf16>
    %cst_17 = arith.constant dense<0.000000e+00> : vector<16x128xf32>
    %23 = tpu.matmul %20, %22, %cst_17 {dimension_numbers = #tpu.dot_dimension_numbers<[1], [0], [0], [1], [0, 0, 1, 1], [], []>} : vector<16x128xbf16>, vector<128x128xbf16>, vector<16x128xf32> -> vector<16x128xf32>
    %c2 = arith.constant 2 : index
    %c0_18 = arith.constant 0 : index
    %c0_19 = arith.constant 0 : index
    %24 = vector.load %arg4[%c2, %c0_18, %c0_19] : memref<6x1x128xf32, #tpu.memory_space<vmem>>, vector<1x1x128xf32>
    %25 = vector.shape_cast %24 : vector<1x1x128xf32> to vector<1x128xf32>
    %26 = vector.broadcast %25 : vector<1x128xf32> to vector<16x128xf32>
    %27 = arith.addf %23, %26 : vector<16x128xf32>
    %cst_20 = arith.constant 0.000000e+00 : f32
    %28 = vector.broadcast %cst_20 : f32 to vector<16x128xf32>
    %29 = arith.maximumf %27, %28 : vector<16x128xf32>
    %30 = arith.truncf %29 : vector<16x128xf32> to vector<16x128xbf16>
    %c2_21 = arith.constant 2 : index
    %c0_22 = arith.constant 0 : index
    %c0_23 = arith.constant 0 : index
    %31 = vector.load %arg3[%c2_21, %c0_22, %c0_23] : memref<5x128x128xbf16, #tpu.memory_space<vmem>>, vector<1x128x128xbf16>
    %32 = vector.shape_cast %31 : vector<1x128x128xbf16> to vector<128x128xbf16>
    %cst_24 = arith.constant dense<0.000000e+00> : vector<16x128xf32>
    %33 = tpu.matmul %30, %32, %cst_24 {dimension_numbers = #tpu.dot_dimension_numbers<[1], [0], [0], [1], [0, 0, 1, 1], [], []>} : vector<16x128xbf16>, vector<128x128xbf16>, vector<16x128xf32> -> vector<16x128xf32>
    %c3 = arith.constant 3 : index
    %c0_25 = arith.constant 0 : index
    %c0_26 = arith.constant 0 : index
    %34 = vector.load %arg4[%c3, %c0_25, %c0_26] : memref<6x1x128xf32, #tpu.memory_space<vmem>>, vector<1x1x128xf32>
    %35 = vector.shape_cast %34 : vector<1x1x128xf32> to vector<1x128xf32>
    %36 = vector.broadcast %35 : vector<1x128xf32> to vector<16x128xf32>
    %37 = arith.addf %33, %36 : vector<16x128xf32>
    %cst_27 = arith.constant 0.000000e+00 : f32
    %38 = vector.broadcast %cst_27 : f32 to vector<16x128xf32>
    %39 = arith.maximumf %37, %38 : vector<16x128xf32>
    %40 = arith.truncf %39 : vector<16x128xf32> to vector<16x128xbf16>
    %c3_28 = arith.constant 3 : index
    %c0_29 = arith.constant 0 : index
    %c0_30 = arith.constant 0 : index
    %41 = vector.load %arg3[%c3_28, %c0_29, %c0_30] : memref<5x128x128xbf16, #tpu.memory_space<vmem>>, vector<1x128x128xbf16>
    %42 = vector.shape_cast %41 : vector<1x128x128xbf16> to vector<128x128xbf16>
    %cst_31 = arith.constant dense<0.000000e+00> : vector<16x128xf32>
    %43 = tpu.matmul %40, %42, %cst_31 {dimension_numbers = #tpu.dot_dimension_numbers<[1], [0], [0], [1], [0, 0, 1, 1], [], []>} : vector<16x128xbf16>, vector<128x128xbf16>, vector<16x128xf32> -> vector<16x128xf32>
    %c4 = arith.constant 4 : index
    %c0_32 = arith.constant 0 : index
    %c0_33 = arith.constant 0 : index
    %44 = vector.load %arg4[%c4, %c0_32, %c0_33] : memref<6x1x128xf32, #tpu.memory_space<vmem>>, vector<1x1x128xf32>
    %45 = vector.shape_cast %44 : vector<1x1x128xf32> to vector<1x128xf32>
    %46 = vector.broadcast %45 : vector<1x128xf32> to vector<16x128xf32>
    %47 = arith.addf %43, %46 : vector<16x128xf32>
    %cst_34 = arith.constant 0.000000e+00 : f32
    %48 = vector.broadcast %cst_34 : f32 to vector<16x128xf32>
    %49 = arith.maximumf %47, %48 : vector<16x128xf32>
    %50 = arith.truncf %49 : vector<16x128xf32> to vector<16x128xbf16>
    %c4_35 = arith.constant 4 : index
    %c0_36 = arith.constant 0 : index
    %c0_37 = arith.constant 0 : index
    %51 = vector.load %arg3[%c4_35, %c0_36, %c0_37] : memref<5x128x128xbf16, #tpu.memory_space<vmem>>, vector<1x128x128xbf16>
    %52 = vector.shape_cast %51 : vector<1x128x128xbf16> to vector<128x128xbf16>
    %cst_38 = arith.constant dense<0.000000e+00> : vector<16x128xf32>
    %53 = tpu.matmul %50, %52, %cst_38 {dimension_numbers = #tpu.dot_dimension_numbers<[1], [0], [0], [1], [0, 0, 1, 1], [], []>} : vector<16x128xbf16>, vector<128x128xbf16>, vector<16x128xf32> -> vector<16x128xf32>
    %c5 = arith.constant 5 : index
    %c0_39 = arith.constant 0 : index
    %c0_40 = arith.constant 0 : index
    %54 = vector.load %arg4[%c5, %c0_39, %c0_40] : memref<6x1x128xf32, #tpu.memory_space<vmem>>, vector<1x1x128xf32>
    %55 = vector.shape_cast %54 : vector<1x1x128xf32> to vector<1x128xf32>
    %56 = vector.broadcast %55 : vector<1x128xf32> to vector<16x128xf32>
    %57 = arith.addf %53, %56 : vector<16x128xf32>
    %c0_41 = arith.constant 0 : index
    %c0_42 = arith.constant 0 : index
    %58 = vector.load %arg5[%c0_41, %c0_42] : memref<16x128xf32, #tpu.memory_space<vmem>>, vector<16x128xf32>
    tpu.vector_store %arg5[%c0_41, %c0_42], %57 {strides = array<i32>} : memref<16x128xf32, #tpu.memory_space<vmem>>, vector<16x128xf32>,
    return
  }
  func.func @transform_0(%arg0: i32) -> (i32, i32) {
    %c0_i32 = arith.constant 0 : i32
    %c0_i32_0 = arith.constant 0 : i32
    return %arg0, %c0_i32 : i32, i32
  }
  func.func @transform_1(%arg0: i32) -> (i32, i32) {
    %c0_i32 = arith.constant 0 : i32
    %c0_i32_0 = arith.constant 0 : i32
    %c0_i32_1 = arith.constant 0 : i32
    return %c0_i32, %c0_i32_0 : i32, i32
  }
  func.func @transform_2(%arg0: i32) -> (i32, i32, i32) {
    %c0_i32 = arith.constant 0 : i32
    %c0_i32_0 = arith.constant 0 : i32
    %c0_i32_1 = arith.constant 0 : i32
    %c0_i32_2 = arith.constant 0 : i32
    return %c0_i32, %c0_i32_0, %c0_i32_1 : i32, i32, i32
  }
  func.func @transform_3(%arg0: i32) -> (i32, i32, i32) {
    %c0_i32 = arith.constant 0 : i32
    %c0_i32_0 = arith.constant 0 : i32
    %c0_i32_1 = arith.constant 0 : i32
    %c0_i32_2 = arith.constant 0 : i32
    return %c0_i32, %c0_i32_0, %c0_i32_1 : i32, i32, i32
  }
  func.func @transform_4(%arg0: i32) -> (i32, i32) {
    %c0_i32 = arith.constant 0 : i32
    %c0_i32_0 = arith.constant 0 : i32
    return %arg0, %c0_i32 : i32, i32
  }
}

</mosaic_0001>

<llo_original>
// kernel: mlp_forward.1
$region0: #{mlp_forward.1}
  #allocation0 [shape = 'u32[]', space=smem, size = 0x4, offset = 0x4, fixed_abs, tag = 'smem constant byte address 0x4 - core index']
  #allocation1 [shape = 'u32[144,128]{1,0:T(1,128)}', space=vmem, size = 0x12000, scoped, tag = 'internal scratch']
  %s0 = inlined_call_operand.vmem [shape: f32[16,8], index: 0, kind: input, shape index: {}]
  %s1 = inlined_call_operand.vmem [shape: bf16[8,128], index: 1, kind: input, shape index: {}]
  %s2 = inlined_call_operand.hbm [shape: bf16[5,128,128], index: 2, kind: input, shape index: {}]
  %s3 = inlined_call_operand.vmem [shape: f32[6,1,128], index: 3, kind: input, shape index: {}]
  %s4 = inlined_call_operand.vmem [shape: f32[16,128], index: 4, kind: output, shape index: {}]
  %s5 = sld [smem:[#allocation0]]
  $region30: #{mlp_forward.1} parent=0
    _
  %s7 = ssub.s32 1, %s5
  %s8 = scalar_select 0, %s7, %s5
  $region1: #{mlp_forward.1} parent=0
    #allocation2 [shape = 'u8[163840]{0}', space=vmem, size = 0x28000, scoped, tag = 'input window, operand 2, single buffered']
    #allocation3 [shape = 's32[1]{0}', space=sflag, size = 0x4, scoped, tag = 'scoped memory for mlp_forward.1']
    %9 = vsyncpa [#allocation3], 0
    // Predicated region
    $region2: #{mlp_forward.1} parent=1 // pred_check
      _
    $region3: #{mlp_forward.1} parent=1 // pred_check_branch
      %11 = sbr.rel (0) target = $region5
    $region4: #{mlp_forward.1} parent=1 // pred_region
      _
    $region5: #{mlp_forward.1} parent=1 // pred_fallthru
      _
    // Predicated region
    $region6: #{mlp_forward.1} parent=1 // pred_check
      _
    $region7: #{mlp_forward.1} parent=1 // pred_check_branch
      %13 = sbr.rel (0) target = $region9
    $region8: #{mlp_forward.1} parent=1 // pred_region
      _
    $region9: #{mlp_forward.1} parent=1 // pred_fallthru
      _
    // Predicated region
    $region10: #{mlp_forward.1} parent=1 // pred_check
      _
    $region11: #{mlp_forward.1} parent=1 // pred_check_branch
      %15 = sbr.rel (0) target = $region13
    $region12: #{mlp_forward.1} parent=1 // pred_region
      %s17 = ssub.s32 5120, 5120
      %18 = vsyncadd [#allocation3], %s17
      %s19 = sshll.u32 [#allocation2], 4
      %s20 = int_to_ptr.vmem [resolvable:$true] %s19
      %25 = dma.hbm_to_vmem [thread:$0]  %s2, 5120, %s20, [#allocation3], 64, 64, 4
    $region13: #{mlp_forward.1} parent=1 // pred_fallthru
      _
    // Predicated region
    $region14: #{mlp_forward.1} parent=1 // pred_check
      _
    $region15: #{mlp_forward.1} parent=1 // pred_check_branch
      %27 = sbr.rel (0) target = $region17
    $region16: #{mlp_forward.1} parent=1 // pred_region
      _
    $region17: #{mlp_forward.1} parent=1 // pred_fallthru
      _
    // Predicated region
    $region18: #{mlp_forward.1} parent=1 // pred_check
      _
    $region19: #{mlp_forward.1} parent=1 // pred_check_branch
      %29 = sbr.rel (0) target = $region21
    $region20: #{mlp_forward.1} parent=1 // pred_region
      %30 = dma.done [#allocation3], 5120
    $region21: #{mlp_forward.1} parent=1 // pred_fallthru
      _
    %v32 = vld [vmem:[%s0] sm:$0xff]
    %v33 = vld [vmem:[%s0 + $0x8] sm:$0xff]
    %v34 = vpack.c.bf16 %v33, %v32
    %v35 = vld [vmem:[%s1] sm:$0xf]
    %v36 = vld [vmem:[%s3] sm:$0x1]
    %v38 = vlaneseq
    %v39 = vshrl.u32 %v38, 7
    %v40 = vsub.s32 0, %v39
    %v41 = vrot.slane %v36, %v40
    %vm43 = vcmask 64512
    %v45 = vsel %vm43, %v34, 0
    %vm47 = vcmask 1043456
    %v49 = vsel %vm47, %v35, 0
    %51 = vmatprep.subr.bf16.mxu0 0
    %52 = vmatpush1.bf16.msra.mxu0 %v49
    %53 = vmatprep.subr.bf16.mxu0 0
    %54 = vmatpush1.bf16.msra.mxu0 0
    %55 = vmatprep.subr.bf16.mxu0 0
    %56 = vmatpush1.bf16.msra.mxu0 0
    %57 = vmatprep.subr.bf16.mxu0 0
    %58 = vmatpush1.bf16.msra.mxu0 0
    %59 = vmatprep.subr.bf16.mxu0 0
    %60 = vmatpush1.bf16.msra.mxu0 0
    %61 = vmatprep.subr.bf16.mxu0 0
    %62 = vmatpush1.bf16.msra.mxu0 0
    %63 = vmatprep.subr.bf16.mxu0 0
    %64 = vmatpush1.bf16.msra.mxu0 0
    %65 = vmatprep.subr.bf16.mxu0 0
    %66 = vmatpush1.bf16.msra.mxu0 0
    %67 = vmatprep.subr.bf16.mxu0 0
    %68 = vmatpush1.bf16.msra.mxu0 0
    %69 = vmatprep.subr.bf16.mxu0 0
    %70 = vmatpush1.bf16.msra.mxu0 0
    %71 = vmatprep.subr.bf16.mxu0 0
    %72 = vmatpush1.bf16.msra.mxu0 0
    %73 = vmatprep.subr.bf16.mxu0 0
    %74 = vmatpush1.bf16.msra.mxu0 0
    %75 = vmatprep.subr.bf16.mxu0 0
    %76 = vmatpush1.bf16.msra.mxu0 0
    %77 = vmatprep.subr.bf16.mxu0 0
    %78 = vmatpush1.bf16.msra.mxu0 0
    %79 = vmatprep.subr.bf16.mxu0 0
    %80 = vmatpush1.bf16.msra.mxu0 0
    %81 = vmatprep.subr.bf16.mxu0 0
    %82 = vmatpush1.bf16.msra.mxu0 0
    %83 = vmatprep.mubr.bf16.mxu0 0
    %84 = vmatmul.mubr.bf16.gmra.mrb[0].mxu0 %v45
    %v85 = vpop.f32.mrb[0].mxu0
    %v86 = vadd.f32 %v41, %v85
    %v87 = vpop.f32.mrb[0].mxu0
    %v88 = vpop.f32.mrb[0].mxu0
    %v89 = vadd.f32 %v41, %v88
    %v90 = vpop.f32.mrb[0].mxu0
    %91 = vdwg.mxu0
    %v92 = vmax.f32 %v86, 0.0
    %v93 = vmax.f32 %v89, 0.0
    %v94 = vpack.c.bf16 %v93, %v92
    %v95 = vld [vmem:[#allocation2] sm:$0xf]
    %v96 = vld [vmem:[#allocation2 + $0x4] sm:$0xf]
    %v97 = vld [vmem:[#allocation2 + $0x8] sm:$0xf]
    %v98 = vld [vmem:[#allocation2 + $0xc] sm:$0xf]
    %v99 = vld [vmem:[#allocation2 + $0x10] sm:$0xf]
    %v100 = vld [vmem:[#allocation2 + $0x14] sm:$0xf]
    %v101 = vld [vmem:[#allocation2 + $0x18] sm:$0xf]
    %v102 = vld [vmem:[#allocation2 + $0x1c] sm:$0xf]
    %v103 = vld [vmem:[#allocation2 + $0x20] sm:$0xf]
    %v104 = vld [vmem:[#allocation2 + $0x24] sm:$0xf]
    %v105 = vld [vmem:[#allocation2 + $0x28] sm:$0xf]
    %v106 = vld [vmem:[#allocation2 + $0x2c] sm:$0xf]
    %v107 = vld [vmem:[#allocation2 + $0x30] sm:$0xf]
    %v108 = vld [vmem:[#allocation2 + $0x34] sm:$0xf]
    %v109 = vld [vmem:[#allocation2 + $0x38] sm:$0xf]
    %v110 = vld [vmem:[#allocation2 + $0x3c] sm:$0xf]
    %s111 = scalar_lea.vmem %s3, 1
    %v112 = vld [vmem:[%s111] sm:$0x1]
    %v114 = vlaneseq
    %v115 = vshrl.u32 %v114, 7
    %v116 = vsub.s32 0, %v115
    %v117 = vrot.slane %v112, %v116
    %v135 = vunpack.c.l.b16 %v95
    %v136 = vunpack.c.l.b16 %v96
    %v137 = vunpack.c.l.b16 %v97
    %v138 = vunpack.c.l.b16 %v98
    %v139 = vunpack.c.l.b16 %v99
    %v140 = vunpack.c.l.b16 %v100
    %v141 = vunpack.c.l.b16 %v101
    %v142 = vunpack.c.l.b16 %v102
    %v143 = vunpack.c.l.b16 %v103
    %v144 = vunpack.c.l.b16 %v104
    %v145 = vunpack.c.l.b16 %v105
    %v146 = vunpack.c.l.b16 %v106
    %v147 = vunpack.c.l.b16 %v107
    %v148 = vunpack.c.l.b16 %v108
    %v149 = vunpack.c.l.b16 %v109
    %v150 = vunpack.c.l.b16 %v110
    %v151 = vpack.c.b16 %v136, %v135
    %v152 = vpack.c.b16 %v138, %v137
    %v153 = vpack.c.b16 %v140, %v139
    %v154 = vpack.c.b16 %v142, %v141
    %v155 = vpack.c.b16 %v144, %v143
    %v156 = vpack.c.b16 %v146, %v145
    %v157 = vpack.c.b16 %v148, %v147
    %v158 = vpack.c.b16 %v150, %v149
    %167 = vmatprep.subr.bf16.mxu0 0
    %168 = vmatpush1.bf16.msra.mxu0 %v151
    %169 = vmatprep.subr.bf16.mxu0 0
    %170 = vmatpush1.bf16.msra.mxu0 %v152
    %171 = vmatprep.subr.bf16.mxu0 0
    %172 = vmatpush1.bf16.msra.mxu0 %v153
    %173 = vmatprep.subr.bf16.mxu0 0
    %174 = vmatpush1.bf16.msra.mxu0 %v154
    %175 = vmatprep.subr.bf16.mxu0 0
    %176 = vmatpush1.bf16.msra.mxu0 %v155
    %177 = vmatprep.subr.bf16.mxu0 0
    %178 = vmatpush1.bf16.msra.mxu0 %v156
    %179 = vmatprep.subr.bf16.mxu0 0
    %180 = vmatpush1.bf16.msra.mxu0 %v157
    %181 = vmatprep.subr.bf16.mxu0 0
    %182 = vmatpush1.bf16.msra.mxu0 %v158
    %183 = vmatprep.subr.bf16.mxu0 0
    %184 = vmatpush1.bf16.msra.mxu0 0
    %185 = vmatprep.subr.bf16.mxu0 0
    %186 = vmatpush1.bf16.msra.mxu0 0
    %187 = vmatprep.subr.bf16.mxu0 0
    %188 = vmatpush1.bf16.msra.mxu0 0
    %189 = vmatprep.subr.bf16.mxu0 0
    %190 = vmatpush1.bf16.msra.mxu0 0
    %191 = vmatprep.subr.bf16.mxu0 0
    %192 = vmatpush1.bf16.msra.mxu0 0
    %193 = vmatprep.subr.bf16.mxu0 0
    %194 = vmatpush1.bf16.msra.mxu0 0
    %195 = vmatprep.subr.bf16.mxu0 0
    %196 = vmatpush1.bf16.msra.mxu0 0
    %197 = vmatprep.subr.bf16.mxu0 0
    %198 = vmatpush1.bf16.msra.mxu0 0
    %199 = vmatprep.mubr.bf16.mxu0 0
    %200 = vmatmul.mubr.bf16.gmra.mrb[0].mxu0 %v94
    %v201 = vpop.f32.mrb[0].mxu0
    %v202 = vadd.f32 %v117, %v201
    %v203 = vpop.f32.mrb[0].mxu0
    %v204 = vpop.f32.mrb[0].mxu0
    %v205 = vadd.f32 %v117, %v204
    %v206 = vpop.f32.mrb[0].mxu0
    %207 = vdwg.mxu0
    %v208 = vmax.f32 %v202, 0.0
    %v209 = vmax.f32 %v205, 0.0
    %v210 = vpack.c.bf16 %v209, %v208
    %s211 = scalar_lea.vmem [#allocation2], 64
    %v212 = vld [vmem:[%s211] sm:$0xf]
    %v213 = vld [vmem:[%s211 + $0x4] sm:$0xf]
    %v214 = vld [vmem:[%s211 + $0x8] sm:$0xf]
    %v215 = vld [vmem:[%s211 + $0xc] sm:$0xf]
    %v216 = vld [vmem:[%s211 + $0x10] sm:$0xf]
    %v217 = vld [vmem:[%s211 + $0x14] sm:$0xf]
    %v218 = vld [vmem:[%s211 + $0x18] sm:$0xf]
    %v219 = vld [vmem:[%s211 + $0x1c] sm:$0xf]
    %v220 = vld [vmem:[%s211 + $0x20] sm:$0xf]
    %v221 = vld [vmem:[%s211 + $0x24] sm:$0xf]
    %v222 = vld [vmem:[%s211 + $0x28] sm:$0xf]
    %v223 = vld [vmem:[%s211 + $0x2c] sm:$0xf]
    %v224 = vld [vmem:[%s211 + $0x30] sm:$0xf]
    %v225 = vld [vmem:[%s211 + $0x34] sm:$0xf]
    %v226 = vld [vmem:[%s211 + $0x38] sm:$0xf]
    %v227 = vld [vmem:[%s211 + $0x3c] sm:$0xf]
    %s228 = scalar_lea.vmem %s3, 2
    %v229 = vld [vmem:[%s228] sm:$0x1]
    %v231 = vlaneseq
    %v232 = vshrl.u32 %v231, 7
    %v233 = vsub.s32 0, %v232
    %v234 = vrot.slane %v229, %v233
    %v252 = vunpack.c.l.b16 %v212
    %v253 = vunpack.c.l.b16 %v213
    %v254 = vunpack.c.l.b16 %v214
    %v255 = vunpack.c.l.b16 %v215
    %v256 = vunpack.c.l.b16 %v216
    %v257 = vunpack.c.l.b16 %v217
    %v258 = vunpack.c.l.b16 %v218
    %v259 = vunpack.c.l.b16 %v219
    %v260 = vunpack.c.l.b16 %v220
    %v261 = vunpack.c.l.b16 %v221
    %v262 = vunpack.c.l.b16 %v222
    %v263 = vunpack.c.l.b16 %v223
    %v264 = vunpack.c.l.b16 %v224
    %v265 = vunpack.c.l.b16 %v225
    %v266 = vunpack.c.l.b16 %v226
    %v267 = vunpack.c.l.b16 %v227
    %v268 = vpack.c.b16 %v253, %v252
    %v269 = vpack.c.b16 %v255, %v254
    %v270 = vpack.c.b16 %v257, %v256
    %v271 = vpack.c.b16 %v259, %v258
    %v272 = vpack.c.b16 %v261, %v260
    %v273 = vpack.c.b16 %v263, %v262
    %v274 = vpack.c.b16 %v265, %v264
    %v275 = vpack.c.b16 %v267, %v266
    %284 = vmatprep.subr.bf16.mxu0 0
    %285 = vmatpush1.bf16.msra.mxu0 %v268
    %286 = vmatprep.subr.bf16.mxu0 0
    %287 = vmatpush1.bf16.msra.mxu0 %v269
    %288 = vmatprep.subr.bf16.mxu0 0
    %289 = vmatpush1.bf16.msra.mxu0 %v270
    %290 = vmatprep.subr.bf16.mxu0 0
    %291 = vmatpush1.bf16.msra.mxu0 %v271
    %292 = vmatprep.subr.bf16.mxu0 0
    %293 = vmatpush1.bf16.msra.mxu0 %v272
    %294 = vmatprep.subr.bf16.mxu0 0
    %295 = vmatpush1.bf16.msra.mxu0 %v273
    %296 = vmatprep.subr.bf16.mxu0 0
    %297 = vmatpush1.bf16.msra.mxu0 %v274
    %298 = vmatprep.subr.bf16.mxu0 0
    %299 = vmatpush1.bf16.msra.mxu0 %v275
    %300 = vmatprep.subr.bf16.mxu0 0
    %301 = vmatpush1.bf16.msra.mxu0 0
    %302 = vmatprep.subr.bf16.mxu0 0
    %303 = vmatpush1.bf16.msra.mxu0 0
    %304 = vmatprep.subr.bf16.mxu0 0
    %305 = vmatpush1.bf16.msra.mxu0 0
    %306 = vmatprep.subr.bf16.mxu0 0
    %307 = vmatpush1.bf16.msra.mxu0 0
    %308 = vmatprep.subr.bf16.mxu0 0
    %309 = vmatpush1.bf16.msra.mxu0 0
    %310 = vmatprep.subr.bf16.mxu0 0
    %311 = vmatpush1.bf16.msra.mxu0 0
    %312 = vmatprep.subr.bf16.mxu0 0
    %313 = vmatpush1.bf16.msra.mxu0 0
    %314 = vmatprep.subr.bf16.mxu0 0
    %315 = vmatpush1.bf16.msra.mxu0 0
    %316 = vmatprep.mubr.bf16.mxu0 0
    %317 = vmatmul.mubr.bf16.gmra.mrb[0].mxu0 %v210
    %v318 = vpop.f32.mrb[0].mxu0
    %v319 = vadd.f32 %v234, %v318
    %v320 = vpop.f32.mrb[0].mxu0
    %v321 = vpop.f32.mrb[0].mxu0
    %v322 = vadd.f32 %v234, %v321
    %v323 = vpop.f32.mrb[0].mxu0
    %324 = vdwg.mxu0
    %v325 = vmax.f32 %v319, 0.0
    %v326 = vmax.f32 %v322, 0.0
    %v327 = vpack.c.bf16 %v326, %v325
    %s328 = scalar_lea.vmem [#allocation2], 128
    %v329 = vld [vmem:[%s328] sm:$0xf]
    %v330 = vld [vmem:[%s328 + $0x4] sm:$0xf]
    %v331 = vld [vmem:[%s328 + $0x8] sm:$0xf]
    %v332 = vld [vmem:[%s328 + $0xc] sm:$0xf]
    %v333 = vld [vmem:[%s328 + $0x10] sm:$0xf]
    %v334 = vld [vmem:[%s328 + $0x14] sm:$0xf]
    %v335 = vld [vmem:[%s328 + $0x18] sm:$0xf]
    %v336 = vld [vmem:[%s328 + $0x1c] sm:$0xf]
    %v337 = vld [vmem:[%s328 + $0x20] sm:$0xf]
    %v338 = vld [vmem:[%s328 + $0x24] sm:$0xf]
    %v339 = vld [vmem:[%s328 + $0x28] sm:$0xf]
    %v340 = vld [vmem:[%s328 + $0x2c] sm:$0xf]
    %v341 = vld [vmem:[%s328 + $0x30] sm:$0xf]
    %v342 = vld [vmem:[%s328 + $0x34] sm:$0xf]
    %v343 = vld [vmem:[%s328 + $0x38] sm:$0xf]
    %v344 = vld [vmem:[%s328 + $0x3c] sm:$0xf]
    %s345 = scalar_lea.vmem %s3, 3
    %v346 = vld [vmem:[%s345] sm:$0x1]
    %v348 = vlaneseq
    %v349 = vshrl.u32 %v348, 7
    %v350 = vsub.s32 0, %v349
    %v351 = vrot.slane %v346, %v350
    %v369 = vunpack.c.l.b16 %v329
    %v370 = vunpack.c.l.b16 %v330
    %v371 = vunpack.c.l.b16 %v331
    %v372 = vunpack.c.l.b16 %v332
    %v373 = vunpack.c.l.b16 %v333
    %v374 = vunpack.c.l.b16 %v334
    %v375 = vunpack.c.l.b16 %v335
    %v376 = vunpack.c.l.b16 %v336
    %v377 = vunpack.c.l.b16 %v337
    %v378 = vunpack.c.l.b16 %v338
    %v379 = vunpack.c.l.b16 %v339
    %v380 = vunpack.c.l.b16 %v340
    %v381 = vunpack.c.l.b16 %v341
    %v382 = vunpack.c.l.b16 %v342
    %v383 = vunpack.c.l.b16 %v343
    %v384 = vunpack.c.l.b16 %v344
    %v385 = vpack.c.b16 %v370, %v369
    %v386 = vpack.c.b16 %v372, %v371
    %v387 = vpack.c.b16 %v374, %v373
    %v388 = vpack.c.b16 %v376, %v375
    %v389 = vpack.c.b16 %v378, %v377
    %v390 = vpack.c.b16 %v380, %v379
    %v391 = vpack.c.b16 %v382, %v381
    %v392 = vpack.c.b16 %v384, %v383
    %401 = vmatprep.subr.bf16.mxu0 0
    %402 = vmatpush1.bf16.msra.mxu0 %v385
    %403 = vmatprep.subr.bf16.mxu0 0
    %404 = vmatpush1.bf16.msra.mxu0 %v386
    %405 = vmatprep.subr.bf16.mxu0 0
    %406 = vmatpush1.bf16.msra.mxu0 %v387
    %407 = vmatprep.subr.bf16.mxu0 0
    %408 = vmatpush1.bf16.msra.mxu0 %v388
    %409 = vmatprep.subr.bf16.mxu0 0
    %410 = vmatpush1.bf16.msra.mxu0 %v389
    %411 = vmatprep.subr.bf16.mxu0 0
    %412 = vmatpush1.bf16.msra.mxu0 %v390
    %413 = vmatprep.subr.bf16.mxu0 0
    %414 = vmatpush1.bf16.msra.mxu0 %v391
    %415 = vmatprep.subr.bf16.mxu0 0
    %416 = vmatpush1.bf16.msra.mxu0 %v392
    %417 = vmatprep.subr.bf16.mxu0 0
    %418 = vmatpush1.bf16.msra.mxu0 0
    %419 = vmatprep.subr.bf16.mxu0 0
    %420 = vmatpush1.bf16.msra.mxu0 0
    %421 = vmatprep.subr.bf16.mxu0 0
    %422 = vmatpush1.bf16.msra.mxu0 0
    %423 = vmatprep.subr.bf16.mxu0 0
    %424 = vmatpush1.bf16.msra.mxu0 0
    %425 = vmatprep.subr.bf16.mxu0 0
    %426 = vmatpush1.bf16.msra.mxu0 0
    %427 = vmatprep.subr.bf16.mxu0 0
    %428 = vmatpush1.bf16.msra.mxu0 0
    %429 = vmatprep.subr.bf16.mxu0 0
    %430 = vmatpush1.bf16.msra.mxu0 0
    %431 = vmatprep.subr.bf16.mxu0 0
    %432 = vmatpush1.bf16.msra.mxu0 0
    %433 = vmatprep.mubr.bf16.mxu0 0
    %434 = vmatmul.mubr.bf16.gmra.mrb[0].mxu0 %v327
    %v435 = vpop.f32.mrb[0].mxu0
    %v436 = vadd.f32 %v351, %v435
    %v437 = vpop.f32.mrb[0].mxu0
    %v438 = vpop.f32.mrb[0].mxu0
    %v439 = vadd.f32 %v351, %v438
    %v440 = vpop.f32.mrb[0].mxu0
    %441 = vdwg.mxu0
    %v442 = vmax.f32 %v436, 0.0
    %v443 = vmax.f32 %v439, 0.0
    %v444 = vpack.c.bf16 %v443, %v442
    %s445 = scalar_lea.vmem [#allocation2], 192
    %v446 = vld [vmem:[%s445] sm:$0xf]
    %v447 = vld [vmem:[%s445 + $0x4] sm:$0xf]
    %v448 = vld [vmem:[%s445 + $0x8] sm:$0xf]
    %v449 = vld [vmem:[%s445 + $0xc] sm:$0xf]
    %v450 = vld [vmem:[%s445 + $0x10] sm:$0xf]
    %v451 = vld [vmem:[%s445 + $0x14] sm:$0xf]
    %v452 = vld [vmem:[%s445 + $0x18] sm:$0xf]
    %v453 = vld [vmem:[%s445 + $0x1c] sm:$0xf]
    %v454 = vld [vmem:[%s445 + $0x20] sm:$0xf]
    %v455 = vld [vmem:[%s445 + $0x24] sm:$0xf]
    %v456 = vld [vmem:[%s445 + $0x28] sm:$0xf]
    %v457 = vld [vmem:[%s445 + $0x2c] sm:$0xf]
    %v458 = vld [vmem:[%s445 + $0x30] sm:$0xf]
    %v459 = vld [vmem:[%s445 + $0x34] sm:$0xf]
    %v460 = vld [vmem:[%s445 + $0x38] sm:$0xf]
    %v461 = vld [vmem:[%s445 + $0x3c] sm:$0xf]
    %s462 = scalar_lea.vmem %s3, 4
    %v463 = vld [vmem:[%s462] sm:$0x1]
    %v465 = vlaneseq
    %v466 = vshrl.u32 %v465, 7
    %v467 = vsub.s32 0, %v466
    %v468 = vrot.slane %v463, %v467
    %v486 = vunpack.c.l.b16 %v446
    %v487 = vunpack.c.l.b16 %v447
    %v488 = vunpack.c.l.b16 %v448
    %v489 = vunpack.c.l.b16 %v449
    %v490 = vunpack.c.l.b16 %v450
    %v491 = vunpack.c.l.b16 %v451
    %v492 = vunpack.c.l.b16 %v452
    %v493 = vunpack.c.l.b16 %v453
    %v494 = vunpack.c.l.b16 %v454
    %v495 = vunpack.c.l.b16 %v455
    %v496 = vunpack.c.l.b16 %v456
    %v497 = vunpack.c.l.b16 %v457
    %v498 = vunpack.c.l.b16 %v458
    %v499 = vunpack.c.l.b16 %v459
    %v500 = vunpack.c.l.b16 %v460
    %v501 = vunpack.c.l.b16 %v461
    %v502 = vpack.c.b16 %v487, %v486
    %v503 = vpack.c.b16 %v489, %v488
    %v504 = vpack.c.b16 %v491, %v490
    %v505 = vpack.c.b16 %v493, %v492
    %v506 = vpack.c.b16 %v495, %v494
    %v507 = vpack.c.b16 %v497, %v496
    %v508 = vpack.c.b16 %v499, %v498
    %v509 = vpack.c.b16 %v501, %v500
    %518 = vmatprep.subr.bf16.mxu0 0
    %519 = vmatpush1.bf16.msra.mxu0 %v502
    %520 = vmatprep.subr.bf16.mxu0 0
    %521 = vmatpush1.bf16.msra.mxu0 %v503
    %522 = vmatprep.subr.bf16.mxu0 0
    %523 = vmatpush1.bf16.msra.mxu0 %v504
    %524 = vmatprep.subr.bf16.mxu0 0
    %525 = vmatpush1.bf16.msra.mxu0 %v505
    %526 = vmatprep.subr.bf16.mxu0 0
    %527 = vmatpush1.bf16.msra.mxu0 %v506
    %528 = vmatprep.subr.bf16.mxu0 0
    %529 = vmatpush1.bf16.msra.mxu0 %v507
    %530 = vmatprep.subr.bf16.mxu0 0
    %531 = vmatpush1.bf16.msra.mxu0 %v508
    %532 = vmatprep.subr.bf16.mxu0 0
    %533 = vmatpush1.bf16.msra.mxu0 %v509
    %534 = vmatprep.subr.bf16.mxu0 0
    %535 = vmatpush1.bf16.msra.mxu0 0
    %536 = vmatprep.subr.bf16.mxu0 0
    %537 = vmatpush1.bf16.msra.mxu0 0
    %538 = vmatprep.subr.bf16.mxu0 0
    %539 = vmatpush1.bf16.msra.mxu0 0
    %540 = vmatprep.subr.bf16.mxu0 0
    %541 = vmatpush1.bf16.msra.mxu0 0
    %542 = vmatprep.subr.bf16.mxu0 0
    %543 = vmatpush1.bf16.msra.mxu0 0
    %544 = vmatprep.subr.bf16.mxu0 0
    %545 = vmatpush1.bf16.msra.mxu0 0
    %546 = vmatprep.subr.bf16.mxu0 0
    %547 = vmatpush1.bf16.msra.mxu0 0
    %548 = vmatprep.subr.bf16.mxu0 0
    %549 = vmatpush1.bf16.msra.mxu0 0
    %550 = vmatprep.mubr.bf16.mxu0 0
    %551 = vmatmul.mubr.bf16.gmra.mrb[0].mxu0 %v444
    %v552 = vpop.f32.mrb[0].mxu0
    %v553 = vadd.f32 %v468, %v552
    %v554 = vpop.f32.mrb[0].mxu0
    %v555 = vpop.f32.mrb[0].mxu0
    %v556 = vadd.f32 %v468, %v555
    %v557 = vpop.f32.mrb[0].mxu0
    %558 = vdwg.mxu0
    %v559 = vmax.f32 %v553, 0.0
    %v560 = vmax.f32 %v556, 0.0
    %v561 = vpack.c.bf16 %v560, %v559
    %s562 = scalar_lea.vmem [#allocation2], 256
    %v563 = vld [vmem:[%s562] sm:$0xf]
    %v564 = vld [vmem:[%s562 + $0x4] sm:$0xf]
    %v565 = vld [vmem:[%s562 + $0x8] sm:$0xf]
    %v566 = vld [vmem:[%s562 + $0xc] sm:$0xf]
    %v567 = vld [vmem:[%s562 + $0x10] sm:$0xf]
    %v568 = vld [vmem:[%s562 + $0x14] sm:$0xf]
    %v569 = vld [vmem:[%s562 + $0x18] sm:$0xf]
    %v570 = vld [vmem:[%s562 + $0x1c] sm:$0xf]
    %v571 = vld [vmem:[%s562 + $0x20] sm:$0xf]
    %v572 = vld [vmem:[%s562 + $0x24] sm:$0xf]
    %v573 = vld [vmem:[%s562 + $0x28] sm:$0xf]
    %v574 = vld [vmem:[%s562 + $0x2c] sm:$0xf]
    %v575 = vld [vmem:[%s562 + $0x30] sm:$0xf]
    %v576 = vld [vmem:[%s562 + $0x34] sm:$0xf]
    %v577 = vld [vmem:[%s562 + $0x38] sm:$0xf]
    %v578 = vld [vmem:[%s562 + $0x3c] sm:$0xf]
    %s579 = scalar_lea.vmem %s3, 5
    %v580 = vld [vmem:[%s579] sm:$0x1]
    %v582 = vlaneseq
    %v583 = vshrl.u32 %v582, 7
    %v584 = vsub.s32 0, %v583
    %v585 = vrot.slane %v580, %v584
    %v603 = vunpack.c.l.b16 %v563
    %v604 = vunpack.c.l.b16 %v564
    %v605 = vunpack.c.l.b16 %v565
    %v606 = vunpack.c.l.b16 %v566
    %v607 = vunpack.c.l.b16 %v567
    %v608 = vunpack.c.l.b16 %v568
    %v609 = vunpack.c.l.b16 %v569
    %v610 = vunpack.c.l.b16 %v570
    %v611 = vunpack.c.l.b16 %v571
    %v612 = vunpack.c.l.b16 %v572
    %v613 = vunpack.c.l.b16 %v573
    %v614 = vunpack.c.l.b16 %v574
    %v615 = vunpack.c.l.b16 %v575
    %v616 = vunpack.c.l.b16 %v576
    %v617 = vunpack.c.l.b16 %v577
    %v618 = vunpack.c.l.b16 %v578
    %v619 = vpack.c.b16 %v604, %v603
    %v620 = vpack.c.b16 %v606, %v605
    %v621 = vpack.c.b16 %v608, %v607
    %v622 = vpack.c.b16 %v610, %v609
    %v623 = vpack.c.b16 %v612, %v611
    %v624 = vpack.c.b16 %v614, %v613
    %v625 = vpack.c.b16 %v616, %v615
    %v626 = vpack.c.b16 %v618, %v617
    %635 = vmatprep.subr.bf16.mxu0 0
    %636 = vmatpush1.bf16.msra.mxu0 %v619
    %637 = vmatprep.subr.bf16.mxu0 0
    %638 = vmatpush1.bf16.msra.mxu0 %v620
    %639 = vmatprep.subr.bf16.mxu0 0
    %640 = vmatpush1.bf16.msra.mxu0 %v621
    %641 = vmatprep.subr.bf16.mxu0 0
    %642 = vmatpush1.bf16.msra.mxu0 %v622
    %643 = vmatprep.subr.bf16.mxu0 0
    %644 = vmatpush1.bf16.msra.mxu0 %v623
    %645 = vmatprep.subr.bf16.mxu0 0
    %646 = vmatpush1.bf16.msra.mxu0 %v624
    %647 = vmatprep.subr.bf16.mxu0 0
    %648 = vmatpush1.bf16.msra.mxu0 %v625
    %649 = vmatprep.subr.bf16.mxu0 0
    %650 = vmatpush1.bf16.msra.mxu0 %v626
    %651 = vmatprep.subr.bf16.mxu0 0
    %652 = vmatpush1.bf16.msra.mxu0 0
    %653 = vmatprep.subr.bf16.mxu0 0
    %654 = vmatpush1.bf16.msra.mxu0 0
    %655 = vmatprep.subr.bf16.mxu0 0
    %656 = vmatpush1.bf16.msra.mxu0 0
    %657 = vmatprep.subr.bf16.mxu0 0
    %658 = vmatpush1.bf16.msra.mxu0 0
    %659 = vmatprep.subr.bf16.mxu0 0
    %660 = vmatpush1.bf16.msra.mxu0 0
    %661 = vmatprep.subr.bf16.mxu0 0
    %662 = vmatpush1.bf16.msra.mxu0 0
    %663 = vmatprep.subr.bf16.mxu0 0
    %664 = vmatpush1.bf16.msra.mxu0 0
    %665 = vmatprep.subr.bf16.mxu0 0
    %666 = vmatpush1.bf16.msra.mxu0 0
    %667 = vmatprep.mubr.bf16.mxu0 0
    %668 = vmatmul.mubr.bf16.gmra.mrb[0].mxu0 %v561
    %v669 = vpop.f32.mrb[0].mxu0
    %v670 = vadd.f32 %v585, %v669
    %v671 = vpop.f32.mrb[0].mxu0
    %v672 = vpop.f32.mrb[0].mxu0
    %v673 = vadd.f32 %v585, %v672
    %v674 = vpop.f32.mrb[0].mxu0
    %675 = vdwg.mxu0
    %676 = vst [vmem:[%s4] sm:$0xff] %v670
    %677 = vst [vmem:[%s4 + $0x8] sm:$0xff] %v673
    // Predicated region
    $region22: #{mlp_forward.1} parent=1 // pred_check
      _
    $region23: #{mlp_forward.1} parent=1 // pred_check_branch
      %679 = sbr.rel (0) target = $region25
    $region24: #{mlp_forward.1} parent=1 // pred_region
      _
    $region25: #{mlp_forward.1} parent=1 // pred_fallthru
      _
    // Predicated region
    $region26: #{mlp_forward.1} parent=1 // pred_check
      _
    $region27: #{mlp_forward.1} parent=1 // pred_check_branch
      %681 = sbr.rel (0) target = $region29
    $region28: #{mlp_forward.1} parent=1 // pred_region
      _
    $region29: #{mlp_forward.1} parent=1 // pred_fallthru
      _
    %682 = vsyncpa [#allocation3], 1

</llo_original>
